<compile_context>
chip_gen: v7x
topology: tpu7x:2x2x1
jax: 0.10.0
libtpu: 0.0.40
codegen_flags: <defaults>
</compile_context>

<pallas_src>
import jax
import jax.numpy as jnp
from jax.experimental import pallas as pl
from jax.experimental.pallas import tpu as pltpu


def _sigmoid(z):
    return 1.0 / (1.0 + jnp.exp(-z))


def _lstm_fc_kernel(x_ref, wih_ref, whh_ref, b_ref, wfc_ref, bfc_ref, out_ref):
    """Whole LSTM + FC in one invocation.

    x_ref   : [T, B, D]   time-major input (batch zero-padded to a sublane multiple)
    wih_ref : [D, 4H]     W_ih^T  (gate order i, f, g, o along the last dim)
    whh_ref : [H, 4H]     W_hh^T
    b_ref   : [1, 4H]     b_ih + b_hh
    wfc_ref : [H, Fp]     W_fc^T  (F zero-padded to a lane multiple)
    bfc_ref : [1, Fp]
    out_ref : [B, Fp]
    """
    T, B, D = x_ref.shape
    H4 = whh_ref.shape[1]
    H = H4 // 4

    wih = wih_ref[...]
    whh = whh_ref[...]
    b = b_ref[...]

    # ---- Hoisted, time-independent input projection (off the serial chain) ----
    if D == 1:
        # K=1 matmul would waste a full MXU push; do it as a VPU outer product.
        x_proj = [x_ref[t] * wih + b for t in range(T)]              # each [B, 4H]
    else:
        x_proj = [jnp.dot(x_ref[t], wih, preferred_element_type=jnp.float32) + b
                  for t in range(T)]

    # ---- Serial recurrence, fully unrolled (T static & small); h,c live in vregs ----
    h = jnp.zeros((B, H), jnp.float32)
    c = jnp.zeros((B, H), jnp.float32)
    for t in range(T):
        gates = x_proj[t] + jnp.dot(h, whh, preferred_element_type=jnp.float32)
        i_g = _sigmoid(gates[:, 0 * H:1 * H])
        f_g = _sigmoid(gates[:, 1 * H:2 * H])
        g_g = jnp.tanh(gates[:, 2 * H:3 * H])
        o_g = _sigmoid(gates[:, 3 * H:4 * H])
        c = f_g * c + i_g * g_g
        h = o_g * jnp.tanh(c)

    # ---- Final fully-connected layer on the last hidden state (lane-dense store) ----
    out_ref[...] = (jnp.dot(h, wfc_ref[...], preferred_element_type=jnp.float32)
                    + bfc_ref[...]).astype(out_ref.dtype)


def _round_up(v, m):
    return (v + m - 1) // m * m


@jax.jit
def simple_lstm_forward(x, w_ih, w_hh, b_ih, b_hh, w_fc, b_fc):
    """x: [B, T, D] float32.  PyTorch-layout LSTM/FC weights.  Returns [B, F] float32."""
    B, T, D = x.shape
    H4 = w_ih.shape[0]            # weight_ih_l0: [4H, D]
    F = w_fc.shape[0]             # fc.weight:    [F, H]

    B_pad = _round_up(max(B, 8), 8)        # full sublanes
    F_pad = _round_up(max(F, 128), 128)    # full lanes -> unmasked output stores

    # Time-major + zero-pad batch (padded rows are discarded after the call).
    x_tm = jnp.transpose(x, (1, 0, 2))                               # [T, B, D]
    x_tm = jnp.pad(x_tm, ((0, 0), (0, B_pad - B), (0, 0)))           # [T, Bp, D]

    wih_t = jnp.transpose(w_ih)                                      # [D, 4H]
    whh_t = jnp.transpose(w_hh)                                      # [H, 4H]
    b_comb = (b_ih + b_hh).reshape(1, H4)                            # [1, 4H]
    wfc_t = jnp.pad(jnp.transpose(w_fc), ((0, 0), (0, F_pad - F)))   # [H, Fp]
    bfc = jnp.pad(b_fc, (0, F_pad - F)).reshape(1, F_pad)            # [1, Fp]

    vmem = pl.BlockSpec(memory_space=pltpu.MemorySpace.VMEM)
    out_padded = pl.pallas_call(
        _lstm_fc_kernel,
        out_shape=jax.ShapeDtypeStruct((B_pad, F_pad), jnp.float32),
        in_specs=[vmem] * 6,      # full arrays resident in VMEM, DMA'd exactly once
        out_specs=vmem,
    )(x_tm, wih_t, whh_t, b_comb, wfc_t, bfc)

    return out_padded[:B, :F]


def _reference_forward(x, w_ih, w_hh, b_ih, b_hh, w_fc, b_fc):
    """Pure-JAX reference matching PyTorch nn.LSTM (batch_first) + nn.Linear."""
    B, T, D = x.shape
    H = w_hh.shape[1]
    hp = jax.lax.Precision.HIGHEST
    h = jnp.zeros((B, H), jnp.float32)
    c = jnp.zeros((B, H), jnp.float32)
    for t in range(T):
        gates = (jnp.dot(x[:, t, :], w_ih.T, precision=hp) + b_ih
                 + jnp.dot(h, w_hh.T, precision=hp) + b_hh)
        i = _sigmoid(gates[:, 0 * H:1 * H])
        f = _sigmoid(gates[:, 1 * H:2 * H])
        g = jnp.tanh(gates[:, 2 * H:3 * H])
        o = _sigmoid(gates[:, 3 * H:4 * H])
        c = f * c + i * g
        h = o * jnp.tanh(c)
    return jnp.dot(h, w_fc.T, precision=hp) + b_fc


if __name__ == "__main__":
    # Module hyper-params from the PyTorch script.
    input_dim = 1
    lstm_output_dim = 32
    future_steps = 10
    batch, seq = 2, 8

    key = jax.random.PRNGKey(0)
    kx, k1, k2, k3, k4, k5, k6 = jax.random.split(key, 7)
    bound = 1.0 / (lstm_output_dim ** 0.5)
    H4 = 4 * lstm_output_dim
    w_ih = jax.random.uniform(k1, (H4, input_dim), jnp.float32, -bound, bound)
    w_hh = jax.random.uniform(k2, (H4, lstm_output_dim), jnp.float32, -bound, bound)
    b_ih = jax.random.uniform(k3, (H4,), jnp.float32, -bound, bound)
    b_hh = jax.random.uniform(k4, (H4,), jnp.float32, -bound, bound)
    w_fc = jax.random.uniform(k5, (future_steps, lstm_output_dim), jnp.float32, -bound, bound)
    b_fc = jax.random.uniform(k6, (future_steps,), jnp.float32, -bound, bound)

    x = jax.random.normal(kx, (batch, seq, input_dim), jnp.float32)

    out = simple_lstm_forward(x, w_ih, w_hh, b_ih, b_hh, w_fc, b_fc)
    out = jax.block_until_ready(out)

    ref = _reference_forward(x, w_ih, w_hh, b_ih, b_hh, w_fc, b_fc)
    assert out.shape == (batch, future_steps)
    assert jnp.allclose(out, ref, atol=1e-4, rtol=1e-4), (out, ref)

    print("KERNEL_OK")
</pallas_src>

<mosaic_0001>
module attributes {stable_mosaic.version = 11 : i64} {
  func.func @_lstm_fc_kernel(%arg0: memref<8x8x1xf32, #tpu.memory_space<vmem>>, %arg1: memref<1x128xf32, #tpu.memory_space<vmem>>, %arg2: memref<32x128xf32, #tpu.memory_space<vmem>>, %arg3: memref<1x128xf32, #tpu.memory_space<vmem>>, %arg4: memref<32x128xf32, #tpu.memory_space<vmem>>, %arg5: memref<1x128xf32, #tpu.memory_space<vmem>>, %arg6: memref<8x128xf32, #tpu.memory_space<vmem>>) attributes {dimension_semantics = [], scalar_prefetch = 0 : i64, scratch_operands = 0 : i64, tpu.core_type = #tpu.core_type<tc>} {
    %c0 = arith.constant 0 : index
    %c0_0 = arith.constant 0 : index
    %0 = vector.load %arg1[%c0, %c0_0] : memref<1x128xf32, #tpu.memory_space<vmem>>, vector<1x128xf32>
    %c0_1 = arith.constant 0 : index
    %c0_2 = arith.constant 0 : index
    %1 = vector.load %arg2[%c0_1, %c0_2] : memref<32x128xf32, #tpu.memory_space<vmem>>, vector<32x128xf32>
    %c0_3 = arith.constant 0 : index
    %c0_4 = arith.constant 0 : index
    %2 = vector.load %arg3[%c0_3, %c0_4] : memref<1x128xf32, #tpu.memory_space<vmem>>, vector<1x128xf32>
    %c0_5 = arith.constant 0 : index
    %c0_6 = arith.constant 0 : index
    %c0_7 = arith.constant 0 : index
    %3 = vector.load %arg0[%c0_5, %c0_6, %c0_7] : memref<8x8x1xf32, #tpu.memory_space<vmem>>, vector<1x8x1xf32>
    %4 = vector.shape_cast %3 : vector<1x8x1xf32> to vector<8x1xf32>
    %5 = vector.broadcast %4 : vector<8x1xf32> to vector<8x128xf32>
    %6 = vector.broadcast %0 : vector<1x128xf32> to vector<8x128xf32>
    %7 = arith.mulf %5, %6 : vector<8x128xf32>
    %8 = vector.broadcast %2 : vector<1x128xf32> to vector<8x128xf32>
    %9 = arith.addf %7, %8 : vector<8x128xf32>
    %c1 = arith.constant 1 : index
    %c0_8 = arith.constant 0 : index
    %c0_9 = arith.constant 0 : index
    %10 = vector.load %arg0[%c1, %c0_8, %c0_9] : memref<8x8x1xf32, #tpu.memory_space<vmem>>, vector<1x8x1xf32>
    %11 = vector.shape_cast %10 : vector<1x8x1xf32> to vector<8x1xf32>
    %12 = vector.broadcast %11 : vector<8x1xf32> to vector<8x128xf32>
    %13 = vector.broadcast %0 : vector<1x128xf32> to vector<8x128xf32>
    %14 = arith.mulf %12, %13 : vector<8x128xf32>
    %15 = vector.broadcast %2 : vector<1x128xf32> to vector<8x128xf32>
    %16 = arith.addf %14, %15 : vector<8x128xf32>
    %c2 = arith.constant 2 : index
    %c0_10 = arith.constant 0 : index
    %c0_11 = arith.constant 0 : index
    %17 = vector.load %arg0[%c2, %c0_10, %c0_11] : memref<8x8x1xf32, #tpu.memory_space<vmem>>, vector<1x8x1xf32>
    %18 = vector.shape_cast %17 : vector<1x8x1xf32> to vector<8x1xf32>
    %19 = vector.broadcast %18 : vector<8x1xf32> to vector<8x128xf32>
    %20 = vector.broadcast %0 : vector<1x128xf32> to vector<8x128xf32>
    %21 = arith.mulf %19, %20 : vector<8x128xf32>
    %22 = vector.broadcast %2 : vector<1x128xf32> to vector<8x128xf32>
    %23 = arith.addf %21, %22 : vector<8x128xf32>
    %c3 = arith.constant 3 : index
    %c0_12 = arith.constant 0 : index
    %c0_13 = arith.constant 0 : index
    %24 = vector.load %arg0[%c3, %c0_12, %c0_13] : memref<8x8x1xf32, #tpu.memory_space<vmem>>, vector<1x8x1xf32>
    %25 = vector.shape_cast %24 : vector<1x8x1xf32> to vector<8x1xf32>
    %26 = vector.broadcast %25 : vector<8x1xf32> to vector<8x128xf32>
    %27 = vector.broadcast %0 : vector<1x128xf32> to vector<8x128xf32>
    %28 = arith.mulf %26, %27 : vector<8x128xf32>
    %29 = vector.broadcast %2 : vector<1x128xf32> to vector<8x128xf32>
    %30 = arith.addf %28, %29 : vector<8x128xf32>
    %c4 = arith.constant 4 : index
    %c0_14 = arith.constant 0 : index
    %c0_15 = arith.constant 0 : index
    %31 = vector.load %arg0[%c4, %c0_14, %c0_15] : memref<8x8x1xf32, #tpu.memory_space<vmem>>, vector<1x8x1xf32>
    %32 = vector.shape_cast %31 : vector<1x8x1xf32> to vector<8x1xf32>
    %33 = vector.broadcast %32 : vector<8x1xf32> to vector<8x128xf32>
    %34 = vector.broadcast %0 : vector<1x128xf32> to vector<8x128xf32>
    %35 = arith.mulf %33, %34 : vector<8x128xf32>
    %36 = vector.broadcast %2 : vector<1x128xf32> to vector<8x128xf32>
    %37 = arith.addf %35, %36 : vector<8x128xf32>
    %c5 = arith.constant 5 : index
    %c0_16 = arith.constant 0 : index
    %c0_17 = arith.constant 0 : index
    %38 = vector.load %arg0[%c5, %c0_16, %c0_17] : memref<8x8x1xf32, #tpu.memory_space<vmem>>, vector<1x8x1xf32>
    %39 = vector.shape_cast %38 : vector<1x8x1xf32> to vector<8x1xf32>
    %40 = vector.broadcast %39 : vector<8x1xf32> to vector<8x128xf32>
    %41 = vector.broadcast %0 : vector<1x128xf32> to vector<8x128xf32>
    %42 = arith.mulf %40, %41 : vector<8x128xf32>
    %43 = vector.broadcast %2 : vector<1x128xf32> to vector<8x128xf32>
    %44 = arith.addf %42, %43 : vector<8x128xf32>
    %c6 = arith.constant 6 : index
    %c0_18 = arith.constant 0 : index
    %c0_19 = arith.constant 0 : index
    %45 = vector.load %arg0[%c6, %c0_18, %c0_19] : memref<8x8x1xf32, #tpu.memory_space<vmem>>, vector<1x8x1xf32>
    %46 = vector.shape_cast %45 : vector<1x8x1xf32> to vector<8x1xf32>
    %47 = vector.broadcast %46 : vector<8x1xf32> to vector<8x128xf32>
    %48 = vector.broadcast %0 : vector<1x128xf32> to vector<8x128xf32>
    %49 = arith.mulf %47, %48 : vector<8x128xf32>
    %50 = vector.broadcast %2 : vector<1x128xf32> to vector<8x128xf32>
    %51 = arith.addf %49, %50 : vector<8x128xf32>
    %c7 = arith.constant 7 : index
    %c0_20 = arith.constant 0 : index
    %c0_21 = arith.constant 0 : index
    %52 = vector.load %arg0[%c7, %c0_20, %c0_21] : memref<8x8x1xf32, #tpu.memory_space<vmem>>, vector<1x8x1xf32>
    %53 = vector.shape_cast %52 : vector<1x8x1xf32> to vector<8x1xf32>
    %54 = vector.broadcast %53 : vector<8x1xf32> to vector<8x128xf32>
    %55 = vector.broadcast %0 : vector<1x128xf32> to vector<8x128xf32>
    %56 = arith.mulf %54, %55 : vector<8x128xf32>
    %57 = vector.broadcast %2 : vector<1x128xf32> to vector<8x128xf32>
    %58 = arith.addf %56, %57 : vector<8x128xf32>
    %cst = arith.constant 0.000000e+00 : f32
    %59 = vector.broadcast %cst : f32 to vector<8x32xf32>
    %cst_22 = arith.constant 0.000000e+00 : f32
    %60 = vector.broadcast %cst_22 : f32 to vector<8x32xf32>
    %cst_23 = arith.constant dense<0.000000e+00> : vector<8x128xf32>
    %61 = tpu.matmul %59, %1, %cst_23 {dimension_numbers = #tpu.dot_dimension_numbers<[1], [0], [0], [1], [0, 0, 1, 1], [], []>} : vector<8x32xf32>, vector<32x128xf32>, vector<8x128xf32> -> vector<8x128xf32>
    %62 = arith.addf %9, %61 : vector<8x128xf32>
    %63 = vector.extract_strided_slice %62 {offsets = [0, 0], sizes = [8, 32], strides = [1, 1]} : vector<8x128xf32> to vector<8x32xf32>
    %cst_24 = arith.constant 0.000000e+00 : f32
    %64 = vector.broadcast %cst_24 : f32 to vector<8x32xf32>
    %65 = arith.subf %64, %63 : vector<8x32xf32>
    %66 = math.exp %65 : vector<8x32xf32>
    %cst_25 = arith.constant 1.000000e+00 : f32
    %67 = vector.broadcast %cst_25 : f32 to vector<8x32xf32>
    %68 = arith.addf %67, %66 : vector<8x32xf32>
    %cst_26 = arith.constant 1.000000e+00 : f32
    %69 = vector.broadcast %cst_26 : f32 to vector<8x32xf32>
    %70 = arith.divf %69, %68 : vector<8x32xf32>
    %71 = vector.extract_strided_slice %62 {offsets = [0, 32], sizes = [8, 32], strides = [1, 1]} : vector<8x128xf32> to vector<8x32xf32>
    %cst_27 = arith.constant 0.000000e+00 : f32
    %72 = vector.broadcast %cst_27 : f32 to vector<8x32xf32>
    %73 = arith.subf %72, %71 : vector<8x32xf32>
    %74 = math.exp %73 : vector<8x32xf32>
    %cst_28 = arith.constant 1.000000e+00 : f32
    %75 = vector.broadcast %cst_28 : f32 to vector<8x32xf32>
    %76 = arith.addf %75, %74 : vector<8x32xf32>
    %cst_29 = arith.constant 1.000000e+00 : f32
    %77 = vector.broadcast %cst_29 : f32 to vector<8x32xf32>
    %78 = arith.divf %77, %76 : vector<8x32xf32>
    %79 = vector.extract_strided_slice %62 {offsets = [0, 64], sizes = [8, 32], strides = [1, 1]} : vector<8x128xf32> to vector<8x32xf32>
    %80 = math.tanh %79 : vector<8x32xf32>
    %81 = vector.extract_strided_slice %62 {offsets = [0, 96], sizes = [8, 32], strides = [1, 1]} : vector<8x128xf32> to vector<8x32xf32>
    %cst_30 = arith.constant 0.000000e+00 : f32
    %82 = vector.broadcast %cst_30 : f32 to vector<8x32xf32>
    %83 = arith.subf %82, %81 : vector<8x32xf32>
    %84 = math.exp %83 : vector<8x32xf32>
    %cst_31 = arith.constant 1.000000e+00 : f32
    %85 = vector.broadcast %cst_31 : f32 to vector<8x32xf32>
    %86 = arith.addf %85, %84 : vector<8x32xf32>
    %cst_32 = arith.constant 1.000000e+00 : f32
    %87 = vector.broadcast %cst_32 : f32 to vector<8x32xf32>
    %88 = arith.divf %87, %86 : vector<8x32xf32>
    %89 = arith.mulf %78, %60 : vector<8x32xf32>
    %90 = arith.mulf %70, %80 : vector<8x32xf32>
    %91 = arith.addf %89, %90 : vector<8x32xf32>
    %92 = math.tanh %91 : vector<8x32xf32>
    %93 = arith.mulf %88, %92 : vector<8x32xf32>
    %cst_33 = arith.constant dense<0.000000e+00> : vector<8x128xf32>
    %94 = tpu.matmul %93, %1, %cst_33 {dimension_numbers = #tpu.dot_dimension_numbers<[1], [0], [0], [1], [0, 0, 1, 1], [], []>} : vector<8x32xf32>, vector<32x128xf32>, vector<8x128xf32> -> vector<8x128xf32>
    %95 = arith.addf %16, %94 : vector<8x128xf32>
    %96 = vector.extract_strided_slice %95 {offsets = [0, 0], sizes = [8, 32], strides = [1, 1]} : vector<8x128xf32> to vector<8x32xf32>
    %cst_34 = arith.constant 0.000000e+00 : f32
    %97 = vector.broadcast %cst_34 : f32 to vector<8x32xf32>
    %98 = arith.subf %97, %96 : vector<8x32xf32>
    %99 = math.exp %98 : vector<8x32xf32>
    %cst_35 = arith.constant 1.000000e+00 : f32
    %100 = vector.broadcast %cst_35 : f32 to vector<8x32xf32>
    %101 = arith.addf %100, %99 : vector<8x32xf32>
    %cst_36 = arith.constant 1.000000e+00 : f32
    %102 = vector.broadcast %cst_36 : f32 to vector<8x32xf32>
    %103 = arith.divf %102, %101 : vector<8x32xf32>
    %104 = vector.extract_strided_slice %95 {offsets = [0, 32], sizes = [8, 32], strides = [1, 1]} : vector<8x128xf32> to vector<8x32xf32>
    %cst_37 = arith.constant 0.000000e+00 : f32
    %105 = vector.broadcast %cst_37 : f32 to vector<8x32xf32>
    %106 = arith.subf %105, %104 : vector<8x32xf32>
    %107 = math.exp %106 : vector<8x32xf32>
    %cst_38 = arith.constant 1.000000e+00 : f32
    %108 = vector.broadcast %cst_38 : f32 to vector<8x32xf32>
    %109 = arith.addf %108, %107 : vector<8x32xf32>
    %cst_39 = arith.constant 1.000000e+00 : f32
    %110 = vector.broadcast %cst_39 : f32 to vector<8x32xf32>
    %111 = arith.divf %110, %109 : vector<8x32xf32>
    %112 = vector.extract_strided_slice %95 {offsets = [0, 64], sizes = [8, 32], strides = [1, 1]} : vector<8x128xf32> to vector<8x32xf32>
    %113 = math.tanh %112 : vector<8x32xf32>
    %114 = vector.extract_strided_slice %95 {offsets = [0, 96], sizes = [8, 32], strides = [1, 1]} : vector<8x128xf32> to vector<8x32xf32>
    %cst_40 = arith.constant 0.000000e+00 : f32
    %115 = vector.broadcast %cst_40 : f32 to vector<8x32xf32>
    %116 = arith.subf %115, %114 : vector<8x32xf32>
    %117 = math.exp %116 : vector<8x32xf32>
    %cst_41 = arith.constant 1.000000e+00 : f32
    %118 = vector.broadcast %cst_41 : f32 to vector<8x32xf32>
    %119 = arith.addf %118, %117 : vector<8x32xf32>
    %cst_42 = arith.constant 1.000000e+00 : f32
    %120 = vector.broadcast %cst_42 : f32 to vector<8x32xf32>
    %121 = arith.divf %120, %119 : vector<8x32xf32>
    %122 = arith.mulf %111, %91 : vector<8x32xf32>
    %123 = arith.mulf %103, %113 : vector<8x32xf32>
    %124 = arith.addf %122, %123 : vector<8x32xf32>
    %125 = math.tanh %124 : vector<8x32xf32>
    %126 = arith.mulf %121, %125 : vector<8x32xf32>
    %cst_43 = arith.constant dense<0.000000e+00> : vector<8x128xf32>
    %127 = tpu.matmul %126, %1, %cst_43 {dimension_numbers = #tpu.dot_dimension_numbers<[1], [0], [0], [1], [0, 0, 1, 1], [], []>} : vector<8x32xf32>, vector<32x128xf32>, vector<8x128xf32> -> vector<8x128xf32>
    %128 = arith.addf %23, %127 : vector<8x128xf32>
    %129 = vector.extract_strided_slice %128 {offsets = [0, 0], sizes = [8, 32], strides = [1, 1]} : vector<8x128xf32> to vector<8x32xf32>
    %cst_44 = arith.constant 0.000000e+00 : f32
    %130 = vector.broadcast %cst_44 : f32 to vector<8x32xf32>
    %131 = arith.subf %130, %129 : vector<8x32xf32>
    %132 = math.exp %131 : vector<8x32xf32>
    %cst_45 = arith.constant 1.000000e+00 : f32
    %133 = vector.broadcast %cst_45 : f32 to vector<8x32xf32>
    %134 = arith.addf %133, %132 : vector<8x32xf32>
    %cst_46 = arith.constant 1.000000e+00 : f32
    %135 = vector.broadcast %cst_46 : f32 to vector<8x32xf32>
    %136 = arith.divf %135, %134 : vector<8x32xf32>
    %137 = vector.extract_strided_slice %128 {offsets = [0, 32], sizes = [8, 32], strides = [1, 1]} : vector<8x128xf32> to vector<8x32xf32>
    %cst_47 = arith.constant 0.000000e+00 : f32
    %138 = vector.broadcast %cst_47 : f32 to vector<8x32xf32>
    %139 = arith.subf %138, %137 : vector<8x32xf32>
    %140 = math.exp %139 : vector<8x32xf32>
    %cst_48 = arith.constant 1.000000e+00 : f32
    %141 = vector.broadcast %cst_48 : f32 to vector<8x32xf32>
    %142 = arith.addf %141, %140 : vector<8x32xf32>
    %cst_49 = arith.constant 1.000000e+00 : f32
    %143 = vector.broadcast %cst_49 : f32 to vector<8x32xf32>
    %144 = arith.divf %143, %142 : vector<8x32xf32>
    %145 = vector.extract_strided_slice %128 {offsets = [0, 64], sizes = [8, 32], strides = [1, 1]} : vector<8x128xf32> to vector<8x32xf32>
    %146 = math.tanh %145 : vector<8x32xf32>
    %147 = vector.extract_strided_slice %128 {offsets = [0, 96], sizes = [8, 32], strides = [1, 1]} : vector<8x128xf32> to vector<8x32xf32>
    %cst_50 = arith.constant 0.000000e+00 : f32
    %148 = vector.broadcast %cst_50 : f32 to vector<8x32xf32>
    %149 = arith.subf %148, %147 : vector<8x32xf32>
    %150 = math.exp %149 : vector<8x32xf32>
    %cst_51 = arith.constant 1.000000e+00 : f32
    %151 = vector.broadcast %cst_51 : f32 to vector<8x32xf32>
    %152 = arith.addf %151, %150 : vector<8x32xf32>
    %cst_52 = arith.constant 1.000000e+00 : f32
    %153 = vector.broadcast %cst_52 : f32 to vector<8x32xf32>
    %154 = arith.divf %153, %152 : vector<8x32xf32>
    %155 = arith.mulf %144, %124 : vector<8x32xf32>
    %156 = arith.mulf %136, %146 : vector<8x32xf32>
    %157 = arith.addf %155, %156 : vector<8x32xf32>
    %158 = math.tanh %157 : vector<8x32xf32>
    %159 = arith.mulf %154, %158 : vector<8x32xf32>
    %cst_53 = arith.constant dense<0.000000e+00> : vector<8x128xf32>
    %160 = tpu.matmul %159, %1, %cst_53 {dimension_numbers = #tpu.dot_dimension_numbers<[1], [0], [0], [1], [0, 0, 1, 1], [], []>} : vector<8x32xf32>, vector<32x128xf32>, vector<8x128xf32> -> vector<8x128xf32>
    %161 = arith.addf %30, %160 : vector<8x128xf32>
    %162 = vector.extract_strided_slice %161 {offsets = [0, 0], sizes = [8, 32], strides = [1, 1]} : vector<8x128xf32> to vector<8x32xf32>
    %cst_54 = arith.constant 0.000000e+00 : f32
    %163 = vector.broadcast %cst_54 : f32 to vector<8x32xf32>
    %164 = arith.subf %163, %162 : vector<8x32xf32>
    %165 = math.exp %164 : vector<8x32xf32>
    %cst_55 = arith.constant 1.000000e+00 : f32
    %166 = vector.broadcast %cst_55 : f32 to vector<8x32xf32>
    %167 = arith.addf %166, %165 : vector<8x32xf32>
    %cst_56 = arith.constant 1.000000e+00 : f32
    %168 = vector.broadcast %cst_56 : f32 to vector<8x32xf32>
    %169 = arith.divf %168, %167 : vector<8x32xf32>
    %170 = vector.extract_strided_slice %161 {offsets = [0, 32], sizes = [8, 32], strides = [1, 1]} : vector<8x128xf32> to vector<8x32xf32>
    %cst_57 = arith.constant 0.000000e+00 : f32
    %171 = vector.broadcast %cst_57 : f32 to vector<8x32xf32>
    %172 = arith.subf %171, %170 : vector<8x32xf32>
    %173 = math.exp %172 : vector<8x32xf32>
    %cst_58 = arith.constant 1.000000e+00 : f32
    %174 = vector.broadcast %cst_58 : f32 to vector<8x32xf32>
    %175 = arith.addf %174, %173 : vector<8x32xf32>
    %cst_59 = arith.constant 1.000000e+00 : f32
    %176 = vector.broadcast %cst_59 : f32 to vector<8x32xf32>
    %177 = arith.divf %176, %175 : vector<8x32xf32>
    %178 = vector.extract_strided_slice %161 {offsets = [0, 64], sizes = [8, 32], strides = [1, 1]} : vector<8x128xf32> to vector<8x32xf32>
    %179 = math.tanh %178 : vector<8x32xf32>
    %180 = vector.extract_strided_slice %161 {offsets = [0, 96], sizes = [8, 32], strides = [1, 1]} : vector<8x128xf32> to vector<8x32xf32>
    %cst_60 = arith.constant 0.000000e+00 : f32
    %181 = vector.broadcast %cst_60 : f32 to vector<8x32xf32>
    %182 = arith.subf %181, %180 : vector<8x32xf32>
    %183 = math.exp %182 : vector<8x32xf32>
    %cst_61 = arith.constant 1.000000e+00 : f32
    %184 = vector.broadcast %cst_61 : f32 to vector<8x32xf32>
    %185 = arith.addf %184, %183 : vector<8x32xf32>
    %cst_62 = arith.constant 1.000000e+00 : f32
    %186 = vector.broadcast %cst_62 : f32 to vector<8x32xf32>
    %187 = arith.divf %186, %185 : vector<8x32xf32>
    %188 = arith.mulf %177, %157 : vector<8x32xf32>
    %189 = arith.mulf %169, %179 : vector<8x32xf32>
    %190 = arith.addf %188, %189 : vector<8x32xf32>
    %191 = math.tanh %190 : vector<8x32xf32>
    %192 = arith.mulf %187, %191 : vector<8x32xf32>
    %cst_63 = arith.constant dense<0.000000e+00> : vector<8x128xf32>
    %193 = tpu.matmul %192, %1, %cst_63 {dimension_numbers = #tpu.dot_dimension_numbers<[1], [0], [0], [1], [0, 0, 1, 1], [], []>} : vector<8x32xf32>, vector<32x128xf32>, vector<8x128xf32> -> vector<8x128xf32>
    %194 = arith.addf %37, %193 : vector<8x128xf32>
    %195 = vector.extract_strided_slice %194 {offsets = [0, 0], sizes = [8, 32], strides = [1, 1]} : vector<8x128xf32> to vector<8x32xf32>
    %cst_64 = arith.constant 0.000000e+00 : f32
    %196 = vector.broadcast %cst_64 : f32 to vector<8x32xf32>
    %197 = arith.subf %196, %195 : vector<8x32xf32>
    %198 = math.exp %197 : vector<8x32xf32>
    %cst_65 = arith.constant 1.000000e+00 : f32
    %199 = vector.broadcast %cst_65 : f32 to vector<8x32xf32>
    %200 = arith.addf %199, %198 : vector<8x32xf32>
    %cst_66 = arith.constant 1.000000e+00 : f32
    %201 = vector.broadcast %cst_66 : f32 to vector<8x32xf32>
    %202 = arith.divf %201, %200 : vector<8x32xf32>
    %203 = vector.extract_strided_slice %194 {offsets = [0, 32], sizes = [8, 32], strides = [1, 1]} : vector<8x128xf32> to vector<8x32xf32>
    %cst_67 = arith.constant 0.000000e+00 : f32
    %204 = vector.broadcast %cst_67 : f32 to vector<8x32xf32>
    %205 = arith.subf %204, %203 : vector<8x32xf32>
    %206 = math.exp %205 : vector<8x32xf32>
    %cst_68 = arith.constant 1.000000e+00 : f32
    %207 = vector.broadcast %cst_68 : f32 to vector<8x32xf32>
    %208 = arith.addf %207, %206 : vector<8x32xf32>
    %cst_69 = arith.constant 1.000000e+00 : f32
    %209 = vector.broadcast %cst_69 : f32 to vector<8x32xf32>
    %210 = arith.divf %209, %208 : vector<8x32xf32>
    %211 = vector.extract_strided_slice %194 {offsets = [0, 64], sizes = [8, 32], strides = [1, 1]} : vector<8x128xf32> to vector<8x32xf32>
    %212 = math.tanh %211 : vector<8x32xf32>
    %213 = vector.extract_strided_slice %194 {offsets = [0, 96], sizes = [8, 32], strides = [1, 1]} : vector<8x128xf32> to vector<8x32xf32>
    %cst_70 = arith.constant 0.000000e+00 : f32
    %214 = vector.broadcast %cst_70 : f32 to vector<8x32xf32>
    %215 = arith.subf %214, %213 : vector<8x32xf32>
    %216 = math.exp %215 : vector<8x32xf32>
    %cst_71 = arith.constant 1.000000e+00 : f32
    %217 = vector.broadcast %cst_71 : f32 to vector<8x32xf32>
    %218 = arith.addf %217, %216 : vector<8x32xf32>
    %cst_72 = arith.constant 1.000000e+00 : f32
    %219 = vector.broadcast %cst_72 : f32 to vector<8x32xf32>
    %220 = arith.divf %219, %218 : vector<8x32xf32>
    %221 = arith.mulf %210, %190 : vector<8x32xf32>
    %222 = arith.mulf %202, %212 : vector<8x32xf32>
    %223 = arith.addf %221, %222 : vector<8x32xf32>
    %224 = math.tanh %223 : vector<8x32xf32>
    %225 = arith.mulf %220, %224 : vector<8x32xf32>
    %cst_73 = arith.constant dense<0.000000e+00> : vector<8x128xf32>
    %226 = tpu.matmul %225, %1, %cst_73 {dimension_numbers = #tpu.dot_dimension_numbers<[1], [0], [0], [1], [0, 0, 1, 1], [], []>} : vector<8x32xf32>, vector<32x128xf32>, vector<8x128xf32> -> vector<8x128xf32>
    %227 = arith.addf %44, %226 : vector<8x128xf32>
    %228 = vector.extract_strided_slice %227 {offsets = [0, 0], sizes = [8, 32], strides = [1, 1]} : vector<8x128xf32> to vector<8x32xf32>
    %cst_74 = arith.constant 0.000000e+00 : f32
    %229 = vector.broadcast %cst_74 : f32 to vector<8x32xf32>
    %230 = arith.subf %229, %228 : vector<8x32xf32>
    %231 = math.exp %230 : vector<8x32xf32>
    %cst_75 = arith.constant 1.000000e+00 : f32
    %232 = vector.broadcast %cst_75 : f32 to vector<8x32xf32>
    %233 = arith.addf %232, %231 : vector<8x32xf32>
    %cst_76 = arith.constant 1.000000e+00 : f32
    %234 = vector.broadcast %cst_76 : f32 to vector<8x32xf32>
    %235 = arith.divf %234, %233 : vector<8x32xf32>
    %236 = vector.extract_strided_slice %227 {offsets = [0, 32], sizes = [8, 32], strides = [1, 1]} : vector<8x128xf32> to vector<8x32xf32>
    %cst_77 = arith.constant 0.000000e+00 : f32
    %237 = vector.broadcast %cst_77 : f32 to vector<8x32xf32>
    %238 = arith.subf %237, %236 : vector<8x32xf32>
    %239 = math.exp %238 : vector<8x32xf32>
    %cst_78 = arith.constant 1.000000e+00 : f32
    %240 = vector.broadcast %cst_78 : f32 to vector<8x32xf32>
    %241 = arith.addf %240, %239 : vector<8x32xf32>
    %cst_79 = arith.constant 1.000000e+00 : f32
    %242 = vector.broadcast %cst_79 : f32 to vector<8x32xf32>
    %243 = arith.divf %242, %241 : vector<8x32xf32>
    %244 = vector.extract_strided_slice %227 {offsets = [0, 64], sizes = [8, 32], strides = [1, 1]} : vector<8x128xf32> to vector<8x32xf32>
    %245 = math.tanh %244 : vector<8x32xf32>
    %246 = vector.extract_strided_slice %227 {offsets = [0, 96], sizes = [8, 32], strides = [1, 1]} : vector<8x128xf32> to vector<8x32xf32>
    %cst_80 = arith.constant 0.000000e+00 : f32
    %247 = vector.broadcast %cst_80 : f32 to vector<8x32xf32>
    %248 = arith.subf %247, %246 : vector<8x32xf32>
    %249 = math.exp %248 : vector<8x32xf32>
    %cst_81 = arith.constant 1.000000e+00 : f32
    %250 = vector.broadcast %cst_81 : f32 to vector<8x32xf32>
    %251 = arith.addf %250, %249 : vector<8x32xf32>
    %cst_82 = arith.constant 1.000000e+00 : f32
    %252 = vector.broadcast %cst_82 : f32 to vector<8x32xf32>
    %253 = arith.divf %252, %251 : vector<8x32xf32>
    %254 = arith.mulf %243, %223 : vector<8x32xf32>
    %255 = arith.mulf %235, %245 : vector<8x32xf32>
    %256 = arith.addf %254, %255 : vector<8x32xf32>
    %257 = math.tanh %256 : vector<8x32xf32>
    %258 = arith.mulf %253, %257 : vector<8x32xf32>
    %cst_83 = arith.constant dense<0.000000e+00> : vector<8x128xf32>
    %259 = tpu.matmul %258, %1, %cst_83 {dimension_numbers = #tpu.dot_dimension_numbers<[1], [0], [0], [1], [0, 0, 1, 1], [], []>} : vector<8x32xf32>, vector<32x128xf32>, vector<8x128xf32> -> vector<8x128xf32>
    %260 = arith.addf %51, %259 : vector<8x128xf32>
    %261 = vector.extract_strided_slice %260 {offsets = [0, 0], sizes = [8, 32], strides = [1, 1]} : vector<8x128xf32> to vector<8x32xf32>
    %cst_84 = arith.constant 0.000000e+00 : f32
    %262 = vector.broadcast %cst_84 : f32 to vector<8x32xf32>
    %263 = arith.subf %262, %261 : vector<8x32xf32>
    %264 = math.exp %263 : vector<8x32xf32>
    %cst_85 = arith.constant 1.000000e+00 : f32
    %265 = vector.broadcast %cst_85 : f32 to vector<8x32xf32>
    %266 = arith.addf %265, %264 : vector<8x32xf32>
    %cst_86 = arith.constant 1.000000e+00 : f32
    %267 = vector.broadcast %cst_86 : f32 to vector<8x32xf32>
    %268 = arith.divf %267, %266 : vector<8x32xf32>
    %269 = vector.extract_strided_slice %260 {offsets = [0, 32], sizes = [8, 32], strides = [1, 1]} : vector<8x128xf32> to vector<8x32xf32>
    %cst_87 = arith.constant 0.000000e+00 : f32
    %270 = vector.broadcast %cst_87 : f32 to vector<8x32xf32>
    %271 = arith.subf %270, %269 : vector<8x32xf32>
    %272 = math.exp %271 : vector<8x32xf32>
    %cst_88 = arith.constant 1.000000e+00 : f32
    %273 = vector.broadcast %cst_88 : f32 to vector<8x32xf32>
    %274 = arith.addf %273, %272 : vector<8x32xf32>
    %cst_89 = arith.constant 1.000000e+00 : f32
    %275 = vector.broadcast %cst_89 : f32 to vector<8x32xf32>
    %276 = arith.divf %275, %274 : vector<8x32xf32>
    %277 = vector.extract_strided_slice %260 {offsets = [0, 64], sizes = [8, 32], strides = [1, 1]} : vector<8x128xf32> to vector<8x32xf32>
    %278 = math.tanh %277 : vector<8x32xf32>
    %279 = vector.extract_strided_slice %260 {offsets = [0, 96], sizes = [8, 32], strides = [1, 1]} : vector<8x128xf32> to vector<8x32xf32>
    %cst_90 = arith.constant 0.000000e+00 : f32
    %280 = vector.broadcast %cst_90 : f32 to vector<8x32xf32>
    %281 = arith.subf %280, %279 : vector<8x32xf32>
    %282 = math.exp %281 : vector<8x32xf32>
    %cst_91 = arith.constant 1.000000e+00 : f32
    %283 = vector.broadcast %cst_91 : f32 to vector<8x32xf32>
    %284 = arith.addf %283, %282 : vector<8x32xf32>
    %cst_92 = arith.constant 1.000000e+00 : f32
    %285 = vector.broadcast %cst_92 : f32 to vector<8x32xf32>
    %286 = arith.divf %285, %284 : vector<8x32xf32>
    %287 = arith.mulf %276, %256 : vector<8x32xf32>
    %288 = arith.mulf %268, %278 : vector<8x32xf32>
    %289 = arith.addf %287, %288 : vector<8x32xf32>
    %290 = math.tanh %289 : vector<8x32xf32>
    %291 = arith.mulf %286, %290 : vector<8x32xf32>
    %cst_93 = arith.constant dense<0.000000e+00> : vector<8x128xf32>
    %292 = tpu.matmul %291, %1, %cst_93 {dimension_numbers = #tpu.dot_dimension_numbers<[1], [0], [0], [1], [0, 0, 1, 1], [], []>} : vector<8x32xf32>, vector<32x128xf32>, vector<8x128xf32> -> vector<8x128xf32>
    %293 = arith.addf %58, %292 : vector<8x128xf32>
    %294 = vector.extract_strided_slice %293 {offsets = [0, 0], sizes = [8, 32], strides = [1, 1]} : vector<8x128xf32> to vector<8x32xf32>
    %cst_94 = arith.constant 0.000000e+00 : f32
    %295 = vector.broadcast %cst_94 : f32 to vector<8x32xf32>
    %296 = arith.subf %295, %294 : vector<8x32xf32>
    %297 = math.exp %296 : vector<8x32xf32>
    %cst_95 = arith.constant 1.000000e+00 : f32
    %298 = vector.broadcast %cst_95 : f32 to vector<8x32xf32>
    %299 = arith.addf %298, %297 : vector<8x32xf32>
    %cst_96 = arith.constant 1.000000e+00 : f32
    %300 = vector.broadcast %cst_96 : f32 to vector<8x32xf32>
    %301 = arith.divf %300, %299 : vector<8x32xf32>
    %302 = vector.extract_strided_slice %293 {offsets = [0, 32], sizes = [8, 32], strides = [1, 1]} : vector<8x128xf32> to vector<8x32xf32>
    %cst_97 = arith.constant 0.000000e+00 : f32
    %303 = vector.broadcast %cst_97 : f32 to vector<8x32xf32>
    %304 = arith.subf %303, %302 : vector<8x32xf32>
    %305 = math.exp %304 : vector<8x32xf32>
    %cst_98 = arith.constant 1.000000e+00 : f32
    %306 = vector.broadcast %cst_98 : f32 to vector<8x32xf32>
    %307 = arith.addf %306, %305 : vector<8x32xf32>
    %cst_99 = arith.constant 1.000000e+00 : f32
    %308 = vector.broadcast %cst_99 : f32 to vector<8x32xf32>
    %309 = arith.divf %308, %307 : vector<8x32xf32>
    %310 = vector.extract_strided_slice %293 {offsets = [0, 64], sizes = [8, 32], strides = [1, 1]} : vector<8x128xf32> to vector<8x32xf32>
    %311 = math.tanh %310 : vector<8x32xf32>
    %312 = vector.extract_strided_slice %293 {offsets = [0, 96], sizes = [8, 32], strides = [1, 1]} : vector<8x128xf32> to vector<8x32xf32>
    %cst_100 = arith.constant 0.000000e+00 : f32
    %313 = vector.broadcast %cst_100 : f32 to vector<8x32xf32>
    %314 = arith.subf %313, %312 : vector<8x32xf32>
    %315 = math.exp %314 : vector<8x32xf32>
    %cst_101 = arith.constant 1.000000e+00 : f32
    %316 = vector.broadcast %cst_101 : f32 to vector<8x32xf32>
    %317 = arith.addf %316, %315 : vector<8x32xf32>
    %cst_102 = arith.constant 1.000000e+00 : f32
    %318 = vector.broadcast %cst_102 : f32 to vector<8x32xf32>
    %319 = arith.divf %318, %317 : vector<8x32xf32>
    %320 = arith.mulf %309, %289 : vector<8x32xf32>
    %321 = arith.mulf %301, %311 : vector<8x32xf32>
    %322 = arith.addf %320, %321 : vector<8x32xf32>
    %323 = math.tanh %322 : vector<8x32xf32>
    %324 = arith.mulf %319, %323 : vector<8x32xf32>
    %c0_103 = arith.constant 0 : index
    %c0_104 = arith.constant 0 : index
    %325 = vector.load %arg4[%c0_103, %c0_104] : memref<32x128xf32, #tpu.memory_space<vmem>>, vector<32x128xf32>
    %cst_105 = arith.constant dense<0.000000e+00> : vector<8x128xf32>
    %326 = tpu.matmul %324, %325, %cst_105 {dimension_numbers = #tpu.dot_dimension_numbers<[1], [0], [0], [1], [0, 0, 1, 1], [], []>} : vector<8x32xf32>, vector<32x128xf32>, vector<8x128xf32> -> vector<8x128xf32>
    %c0_106 = arith.constant 0 : index
    %c0_107 = arith.constant 0 : index
    %327 = vector.load %arg5[%c0_106, %c0_107] : memref<1x128xf32, #tpu.memory_space<vmem>>, vector<1x128xf32>
    %328 = vector.broadcast %327 : vector<1x128xf32> to vector<8x128xf32>
    %329 = arith.addf %326, %328 : vector<8x128xf32>
    %c0_108 = arith.constant 0 : index
    %c0_109 = arith.constant 0 : index
    %330 = vector.load %arg6[%c0_108, %c0_109] : memref<8x128xf32, #tpu.memory_space<vmem>>, vector<8x128xf32>
    tpu.vector_store %arg6[%c0_108, %c0_109], %329 {strides = array<i32>} : memref<8x128xf32, #tpu.memory_space<vmem>>, vector<8x128xf32>,
    return
  }
}

</mosaic_0001>

<llo_original>
// kernel: simple_lstm_forward.1
$region0: #{simple_lstm_forward.1}
  #allocation0 [shape = 'u32[]', space=smem, size = 0x4, offset = 0x4, fixed_abs, tag = 'smem constant byte address 0x4 - core index']
  #allocation1 [shape = 'u32[144,128]{1,0:T(1,128)}', space=vmem, size = 0x12000, scoped, tag = 'internal scratch']
  %s0 = inlined_call_operand.vmem [shape: f32[8,8,1], index: 0, kind: input, shape index: {}]
  %s1 = inlined_call_operand.vmem [shape: f32[1,128], index: 1, kind: input, shape index: {}]
  %s2 = inlined_call_operand.vmem [shape: f32[32,128], index: 2, kind: input, shape index: {}]
  %s3 = inlined_call_operand.vmem [shape: f32[1,128], index: 3, kind: input, shape index: {}]
  %s4 = inlined_call_operand.vmem [shape: f32[32,128], index: 4, kind: input, shape index: {}]
  %s5 = inlined_call_operand.vmem [shape: f32[1,128], index: 5, kind: input, shape index: {}]
  %s6 = inlined_call_operand.vmem [shape: f32[8,128], index: 6, kind: output, shape index: {}]
  %s7 = sld [smem:[#allocation0]]
  $region34: #{simple_lstm_forward.1} parent=0
    _
  %s9 = ssub.s32 1, %s7
  %s10 = scalar_select 0, %s9, %s7
  // Predicated region
  $region2: #{simple_lstm_forward.1} parent=0 // pred_check
    _
  $region3: #{simple_lstm_forward.1} parent=0 // pred_check_branch
    %12 = sbr.rel (0) target = $region5
  $region4: #{simple_lstm_forward.1} parent=0 // pred_region
    _
  $region5: #{simple_lstm_forward.1} parent=0 // pred_fallthru
    _
  // Predicated region
  $region6: #{simple_lstm_forward.1} parent=0 // pred_check
    _
  $region7: #{simple_lstm_forward.1} parent=0 // pred_check_branch
    %14 = sbr.rel (0) target = $region9
  $region8: #{simple_lstm_forward.1} parent=0 // pred_region
    _
  $region9: #{simple_lstm_forward.1} parent=0 // pred_fallthru
    _
  // Predicated region
  $region10: #{simple_lstm_forward.1} parent=0 // pred_check
    _
  $region11: #{simple_lstm_forward.1} parent=0 // pred_check_branch
    %16 = sbr.rel (0) target = $region13
  $region12: #{simple_lstm_forward.1} parent=0 // pred_region
    _
  $region13: #{simple_lstm_forward.1} parent=0 // pred_fallthru
    _
  // Predicated region
  $region14: #{simple_lstm_forward.1} parent=0 // pred_check
    _
  $region15: #{simple_lstm_forward.1} parent=0 // pred_check_branch
    %18 = sbr.rel (0) target = $region17
  $region16: #{simple_lstm_forward.1} parent=0 // pred_region
    _
  $region17: #{simple_lstm_forward.1} parent=0 // pred_fallthru
    _
  // Predicated region
  $region18: #{simple_lstm_forward.1} parent=0 // pred_check
    _
  $region19: #{simple_lstm_forward.1} parent=0 // pred_check_branch
    %20 = sbr.rel (0) target = $region21
  $region20: #{simple_lstm_forward.1} parent=0 // pred_region
    _
  $region21: #{simple_lstm_forward.1} parent=0 // pred_fallthru
    _
  // Predicated region
  $region22: #{simple_lstm_forward.1} parent=0 // pred_check
    _
  $region23: #{simple_lstm_forward.1} parent=0 // pred_check_branch
    %22 = sbr.rel (0) target = $region25
  $region24: #{simple_lstm_forward.1} parent=0 // pred_region
    _
  $region25: #{simple_lstm_forward.1} parent=0 // pred_fallthru
    _
  %v23 = vld [vmem:[%s1] sm:$0x1]
  %v24 = vld [vmem:[%s2] sm:$0xff]
  %v25 = vld [vmem:[%s2 + $0x8] sm:$0xff]
  %v26 = vld [vmem:[%s2 + $0x10] sm:$0xff]
  %v27 = vld [vmem:[%s2 + $0x18] sm:$0xff]
  %v28 = vld [vmem:[%s3] sm:$0x1]
  %v29 = vld [vmem:[%s0] sm:$0xff]
  %31 = vset.pattern.permute.xlu0 0
  %32 = vperm.xlu0 %31, %v29
  %v33 = vpop.permute.xlu0 %32
  %v36 = vlaneseq
  %v37 = vshrl.u32 %v36, 7
  %v38 = vsub.s32 0, %v37
  %v39 = vrot.slane %v23, %v38
  %v41 = vmul.f32 %v33, %v39
  %v43 = vlaneseq
  %v44 = vshrl.u32 %v43, 7
  %v45 = vsub.s32 0, %v44
  %v46 = vrot.slane %v28, %v45
  %v48 = vadd.f32 %v41, %v46
  %s49 = scalar_lea.vmem %s0, 8
  %v50 = vld [vmem:[%s49] sm:$0xff]
  %52 = vset.pattern.permute.xlu0 0
  %53 = vperm.xlu0 %52, %v50
  %v54 = vpop.permute.xlu0 %53
  %v56 = vmul.f32 %v54, %v39
  %v57 = vadd.f32 %v56, %v46
  %s58 = scalar_lea.vmem %s0, 16
  %v59 = vld [vmem:[%s58] sm:$0xff]
  %61 = vset.pattern.permute.xlu0 0
  %62 = vperm.xlu0 %61, %v59
  %v63 = vpop.permute.xlu0 %62
  %v65 = vmul.f32 %v63, %v39
  %v66 = vadd.f32 %v65, %v46
  %s67 = scalar_lea.vmem %s0, 24
  %v68 = vld [vmem:[%s67] sm:$0xff]
  %70 = vset.pattern.permute.xlu0 0
  %71 = vperm.xlu0 %70, %v68
  %v72 = vpop.permute.xlu0 %71
  %v74 = vmul.f32 %v72, %v39
  %v75 = vadd.f32 %v74, %v46
  %s76 = scalar_lea.vmem %s0, 32
  %v77 = vld [vmem:[%s76] sm:$0xff]
  %79 = vset.pattern.permute.xlu0 0
  %80 = vperm.xlu0 %79, %v77
  %v81 = vpop.permute.xlu0 %80
  %v83 = vmul.f32 %v81, %v39
  %v84 = vadd.f32 %v83, %v46
  %s85 = scalar_lea.vmem %s0, 40
  %v86 = vld [vmem:[%s85] sm:$0xff]
  %88 = vset.pattern.permute.xlu0 0
  %89 = vperm.xlu0 %88, %v86
  %v90 = vpop.permute.xlu0 %89
  %v92 = vmul.f32 %v90, %v39
  %v93 = vadd.f32 %v92, %v46
  %s94 = scalar_lea.vmem %s0, 48
  %v95 = vld [vmem:[%s94] sm:$0xff]
  %97 = vset.pattern.permute.xlu0 0
  %98 = vperm.xlu0 %97, %v95
  %v99 = vpop.permute.xlu0 %98
  %v101 = vmul.f32 %v99, %v39
  %v102 = vadd.f32 %v101, %v46
  %s103 = scalar_lea.vmem %s0, 56
  %v104 = vld [vmem:[%s103] sm:$0xff]
  %106 = vset.pattern.permute.xlu0 0
  %107 = vperm.xlu0 %106, %v104
  %v108 = vpop.permute.xlu0 %107
  %v110 = vmul.f32 %v108, %v39
  %v111 = vadd.f32 %v110, %v46
  %vm112 = vcmask 261120
  %v114 = vsel %vm112, 0.0, 0
  %116 = vmatprep.subr.mxu0 0.0
  %117 = vmatpush1.msra.mxu0 %v24
  %118 = vmatprep.subr.mxu0 0.0
  %119 = vmatpush1.msra.mxu0 %v25
  %120 = vmatprep.subr.mxu0 0.0
  %121 = vmatpush1.msra.mxu0 %v26
  %122 = vmatprep.subr.mxu0 0.0
  %123 = vmatpush1.msra.mxu0 %v27
  %124 = vmatprep.subr.mxu0 0.0
  %125 = vmatpush1.msra.mxu0 0.0
  %126 = vmatprep.subr.mxu0 0.0
  %127 = vmatpush1.msra.mxu0 0.0
  %128 = vmatprep.subr.mxu0 0.0
  %129 = vmatpush1.msra.mxu0 0.0
  %130 = vmatprep.subr.mxu0 0.0
  %131 = vmatpush1.msra.mxu0 0.0
  %132 = vmatprep.subr.mxu0 0.0
  %133 = vmatpush1.msra.mxu0 0.0
  %134 = vmatprep.subr.mxu0 0.0
  %135 = vmatpush1.msra.mxu0 0.0
  %136 = vmatprep.subr.mxu0 0.0
  %137 = vmatpush1.msra.mxu0 0.0
  %138 = vmatprep.subr.mxu0 0.0
  %139 = vmatpush1.msra.mxu0 0.0
  %140 = vmatprep.subr.mxu0 0.0
  %141 = vmatpush1.msra.mxu0 0.0
  %142 = vmatprep.subr.mxu0 0.0
  %143 = vmatpush1.msra.mxu0 0.0
  %144 = vmatprep.subr.mxu0 0.0
  %145 = vmatpush1.msra.mxu0 0.0
  %146 = vmatprep.subr.mxu0 0.0
  %147 = vmatpush1.msra.mxu0 0.0
  %148 = vmatprep.subr.mxu0 0.0
  %149 = vmatpush1.msra.mxu0 0.0
  %150 = vmatprep.subr.mxu0 0.0
  %151 = vmatpush1.msra.mxu0 0.0
  %152 = vmatprep.subr.mxu0 0.0
  %153 = vmatpush1.msra.mxu0 0.0
  %154 = vmatprep.subr.mxu0 0.0
  %155 = vmatpush1.msra.mxu0 0.0
  %156 = vmatprep.subr.mxu0 0.0
  %157 = vmatpush1.msra.mxu0 0.0
  %158 = vmatprep.subr.mxu0 0.0
  %159 = vmatpush1.msra.mxu0 0.0
  %160 = vmatprep.subr.mxu0 0.0
  %161 = vmatpush1.msra.mxu0 0.0
  %162 = vmatprep.subr.mxu0 0.0
  %163 = vmatpush1.msra.mxu0 0.0
  %164 = vmatprep.subr.mxu0 0.0
  %165 = vmatpush1.msra.mxu0 0.0
  %166 = vmatprep.subr.mxu0 0.0
  %167 = vmatpush1.msra.mxu0 0.0
  %168 = vmatprep.subr.mxu0 0.0
  %169 = vmatpush1.msra.mxu0 0.0
  %170 = vmatprep.subr.mxu0 0.0
  %171 = vmatpush1.msra.mxu0 0.0
  %172 = vmatprep.subr.mxu0 0.0
  %173 = vmatpush1.msra.mxu0 0.0
  %174 = vmatprep.subr.mxu0 0.0
  %175 = vmatpush1.msra.mxu0 0.0
  %176 = vmatprep.subr.mxu0 0.0
  %177 = vmatpush1.msra.mxu0 0.0
  %178 = vmatprep.subr.mxu0 0.0
  %179 = vmatpush1.msra.mxu0 0.0
  %180 = vmatprep.mubr.f32.mxu0 0.0
  %181 = vmatmul.mubr.f32.gmra.mrb[0].mxu0 %v114
  %v182 = vpop.f32.mrb[0].mxu0
  %v183 = vadd.f32 0.0, %v182
  %v184 = vpop.f32.mrb[0].mxu0
  %185 = vdwg.mxu0
  %v186 = vadd.f32 %v48, %v183
  %v187 = vsub.f32 0.0, %v186
  %v188 = vmul.f32 %v187, 1.442695
  %v189 = vpow.pop %v188
  %v190 = vadd.f32 %v189, 1.0
  %v191 = vrcp.pop %v190
  %v192 = vmul.f32 1.0, %v191
  %v193 = vtanh.pop %v186
  %v194 = vmul.f32 %v192, 0.0
  %196 = vrot.lane.b32.xlu0 %v193, 64
  %v197 = vpop.permute.xlu0 %196
  %v199 = vmul.f32 %v192, %v197
  %201 = vrot.lane.b32.xlu0 %v199, 32
  %v202 = vpop.permute.xlu0 %201
  %v204 = vadd.f32 %v194, %v202
  %v205 = vtanh.pop %v204
  %207 = vrot.lane.b32.xlu0 %v205, 64
  %v208 = vpop.permute.xlu0 %207
  %v210 = vmul.f32 %v192, %v208
  %212 = vrot.lane.b32.xlu0 %v210, 32
  %v213 = vpop.permute.xlu0 %212
  %v214 = vsel %vm112, %v213, 0
  %216 = vmatprep.subr.mxu0 0.0
  %217 = vmatpush1.msra.mxu0 %v24
  %218 = vmatprep.subr.mxu0 0.0
  %219 = vmatpush1.msra.mxu0 %v25
  %220 = vmatprep.subr.mxu0 0.0
  %221 = vmatpush1.msra.mxu0 %v26
  %222 = vmatprep.subr.mxu0 0.0
  %223 = vmatpush1.msra.mxu0 %v27
  %224 = vmatprep.subr.mxu0 0.0
  %225 = vmatpush1.msra.mxu0 0.0
  %226 = vmatprep.subr.mxu0 0.0
  %227 = vmatpush1.msra.mxu0 0.0
  %228 = vmatprep.subr.mxu0 0.0
  %229 = vmatpush1.msra.mxu0 0.0
  %230 = vmatprep.subr.mxu0 0.0
  %231 = vmatpush1.msra.mxu0 0.0
  %232 = vmatprep.subr.mxu0 0.0
  %233 = vmatpush1.msra.mxu0 0.0
  %234 = vmatprep.subr.mxu0 0.0
  %235 = vmatpush1.msra.mxu0 0.0
  %236 = vmatprep.subr.mxu0 0.0
  %237 = vmatpush1.msra.mxu0 0.0
  %238 = vmatprep.subr.mxu0 0.0
  %239 = vmatpush1.msra.mxu0 0.0
  %240 = vmatprep.subr.mxu0 0.0
  %241 = vmatpush1.msra.mxu0 0.0
  %242 = vmatprep.subr.mxu0 0.0
  %243 = vmatpush1.msra.mxu0 0.0
  %244 = vmatprep.subr.mxu0 0.0
  %245 = vmatpush1.msra.mxu0 0.0
  %246 = vmatprep.subr.mxu0 0.0
  %247 = vmatpush1.msra.mxu0 0.0
  %248 = vmatprep.subr.mxu0 0.0
  %249 = vmatpush1.msra.mxu0 0.0
  %250 = vmatprep.subr.mxu0 0.0
  %251 = vmatpush1.msra.mxu0 0.0
  %252 = vmatprep.subr.mxu0 0.0
  %253 = vmatpush1.msra.mxu0 0.0
  %254 = vmatprep.subr.mxu0 0.0
  %255 = vmatpush1.msra.mxu0 0.0
  %256 = vmatprep.subr.mxu0 0.0
  %257 = vmatpush1.msra.mxu0 0.0
  %258 = vmatprep.subr.mxu0 0.0
  %259 = vmatpush1.msra.mxu0 0.0
  %260 = vmatprep.subr.mxu0 0.0
  %261 = vmatpush1.msra.mxu0 0.0
  %262 = vmatprep.subr.mxu0 0.0
  %263 = vmatpush1.msra.mxu0 0.0
  %264 = vmatprep.subr.mxu0 0.0
  %265 = vmatpush1.msra.mxu0 0.0
  %266 = vmatprep.subr.mxu0 0.0
  %267 = vmatpush1.msra.mxu0 0.0
  %268 = vmatprep.subr.mxu0 0.0
  %269 = vmatpush1.msra.mxu0 0.0
  %270 = vmatprep.subr.mxu0 0.0
  %271 = vmatpush1.msra.mxu0 0.0
  %272 = vmatprep.subr.mxu0 0.0
  %273 = vmatpush1.msra.mxu0 0.0
  %274 = vmatprep.subr.mxu0 0.0
  %275 = vmatpush1.msra.mxu0 0.0
  %276 = vmatprep.subr.mxu0 0.0
  %277 = vmatpush1.msra.mxu0 0.0
  %278 = vmatprep.subr.mxu0 0.0
  %279 = vmatpush1.msra.mxu0 0.0
  %280 = vmatprep.mubr.f32.mxu0 0.0
  %281 = vmatmul.mubr.f32.gmra.mrb[0].mxu0 %v214
  %v282 = vpop.f32.mrb[0].mxu0
  %v283 = vadd.f32 0.0, %v282
  %v284 = vpop.f32.mrb[0].mxu0
  %285 = vdwg.mxu0
  %v286 = vadd.f32 %v57, %v283
  %v287 = vsub.f32 0.0, %v286
  %v288 = vmul.f32 %v287, 1.442695
  %v289 = vpow.pop %v288
  %v290 = vadd.f32 %v289, 1.0
  %v291 = vrcp.pop %v290
  %v292 = vmul.f32 1.0, %v291
  %v293 = vtanh.pop %v286
  %v294 = vmul.f32 %v292, %v204
  %296 = vrot.lane.b32.xlu0 %v293, 64
  %v297 = vpop.permute.xlu0 %296
  %v299 = vmul.f32 %v292, %v297
  %301 = vrot.lane.b32.xlu0 %v299, 32
  %v302 = vpop.permute.xlu0 %301
  %v304 = vadd.f32 %v294, %v302
  %v305 = vtanh.pop %v304
  %307 = vrot.lane.b32.xlu0 %v305, 64
  %v308 = vpop.permute.xlu0 %307
  %v310 = vmul.f32 %v292, %v308
  %312 = vrot.lane.b32.xlu0 %v310, 32
  %v313 = vpop.permute.xlu0 %312
  %v314 = vsel %vm112, %v313, 0
  %316 = vmatprep.subr.mxu0 0.0
  %317 = vmatpush1.msra.mxu0 %v24
  %318 = vmatprep.subr.mxu0 0.0
  %319 = vmatpush1.msra.mxu0 %v25
  %320 = vmatprep.subr.mxu0 0.0
  %321 = vmatpush1.msra.mxu0 %v26
  %322 = vmatprep.subr.mxu0 0.0
  %323 = vmatpush1.msra.mxu0 %v27
  %324 = vmatprep.subr.mxu0 0.0
  %325 = vmatpush1.msra.mxu0 0.0
  %326 = vmatprep.subr.mxu0 0.0
  %327 = vmatpush1.msra.mxu0 0.0
  %328 = vmatprep.subr.mxu0 0.0
  %329 = vmatpush1.msra.mxu0 0.0
  %330 = vmatprep.subr.mxu0 0.0
  %331 = vmatpush1.msra.mxu0 0.0
  %332 = vmatprep.subr.mxu0 0.0
  %333 = vmatpush1.msra.mxu0 0.0
  %334 = vmatprep.subr.mxu0 0.0
  %335 = vmatpush1.msra.mxu0 0.0
  %336 = vmatprep.subr.mxu0 0.0
  %337 = vmatpush1.msra.mxu0 0.0
  %338 = vmatprep.subr.mxu0 0.0
  %339 = vmatpush1.msra.mxu0 0.0
  %340 = vmatprep.subr.mxu0 0.0
  %341 = vmatpush1.msra.mxu0 0.0
  %342 = vmatprep.subr.mxu0 0.0
  %343 = vmatpush1.msra.mxu0 0.0
  %344 = vmatprep.subr.mxu0 0.0
  %345 = vmatpush1.msra.mxu0 0.0
  %346 = vmatprep.subr.mxu0 0.0
  %347 = vmatpush1.msra.mxu0 0.0
  %348 = vmatprep.subr.mxu0 0.0
  %349 = vmatpush1.msra.mxu0 0.0
  %350 = vmatprep.subr.mxu0 0.0
  %351 = vmatpush1.msra.mxu0 0.0
  %352 = vmatprep.subr.mxu0 0.0
  %353 = vmatpush1.msra.mxu0 0.0
  %354 = vmatprep.subr.mxu0 0.0
  %355 = vmatpush1.msra.mxu0 0.0
  %356 = vmatprep.subr.mxu0 0.0
  %357 = vmatpush1.msra.mxu0 0.0
  %358 = vmatprep.subr.mxu0 0.0
  %359 = vmatpush1.msra.mxu0 0.0
  %360 = vmatprep.subr.mxu0 0.0
  %361 = vmatpush1.msra.mxu0 0.0
  %362 = vmatprep.subr.mxu0 0.0
  %363 = vmatpush1.msra.mxu0 0.0
  %364 = vmatprep.subr.mxu0 0.0
  %365 = vmatpush1.msra.mxu0 0.0
  %366 = vmatprep.subr.mxu0 0.0
  %367 = vmatpush1.msra.mxu0 0.0
  %368 = vmatprep.subr.mxu0 0.0
  %369 = vmatpush1.msra.mxu0 0.0
  %370 = vmatprep.subr.mxu0 0.0
  %371 = vmatpush1.msra.mxu0 0.0
  %372 = vmatprep.subr.mxu0 0.0
  %373 = vmatpush1.msra.mxu0 0.0
  %374 = vmatprep.subr.mxu0 0.0
  %375 = vmatpush1.msra.mxu0 0.0
  %376 = vmatprep.subr.mxu0 0.0
  %377 = vmatpush1.msra.mxu0 0.0
  %378 = vmatprep.subr.mxu0 0.0
  %379 = vmatpush1.msra.mxu0 0.0
  %380 = vmatprep.mubr.f32.mxu0 0.0
  %381 = vmatmul.mubr.f32.gmra.mrb[0].mxu0 %v314
  %v382 = vpop.f32.mrb[0].mxu0
  %v383 = vadd.f32 0.0, %v382
  %v384 = vpop.f32.mrb[0].mxu0
  %385 = vdwg.mxu0
  %v386 = vadd.f32 %v66, %v383
  %v387 = vsub.f32 0.0, %v386
  %v388 = vmul.f32 %v387, 1.442695
  %v389 = vpow.pop %v388
  %v390 = vadd.f32 %v389, 1.0
  %v391 = vrcp.pop %v390
  %v392 = vmul.f32 1.0, %v391
  %v393 = vtanh.pop %v386
  %v394 = vmul.f32 %v392, %v304
  %396 = vrot.lane.b32.xlu0 %v393, 64
  %v397 = vpop.permute.xlu0 %396
  %v399 = vmul.f32 %v392, %v397
  %401 = vrot.lane.b32.xlu0 %v399, 32
  %v402 = vpop.permute.xlu0 %401
  %v404 = vadd.f32 %v394, %v402
  %v405 = vtanh.pop %v404
  %407 = vrot.lane.b32.xlu0 %v405, 64
  %v408 = vpop.permute.xlu0 %407
  %v410 = vmul.f32 %v392, %v408
  %412 = vrot.lane.b32.xlu0 %v410, 32
  %v413 = vpop.permute.xlu0 %412
  %v414 = vsel %vm112, %v413, 0
  %416 = vmatprep.subr.mxu0 0.0
  %417 = vmatpush1.msra.mxu0 %v24
  %418 = vmatprep.subr.mxu0 0.0
  %419 = vmatpush1.msra.mxu0 %v25
  %420 = vmatprep.subr.mxu0 0.0
  %421 = vmatpush1.msra.mxu0 %v26
  %422 = vmatprep.subr.mxu0 0.0
  %423 = vmatpush1.msra.mxu0 %v27
  %424 = vmatprep.subr.mxu0 0.0
  %425 = vmatpush1.msra.mxu0 0.0
  %426 = vmatprep.subr.mxu0 0.0
  %427 = vmatpush1.msra.mxu0 0.0
  %428 = vmatprep.subr.mxu0 0.0
  %429 = vmatpush1.msra.mxu0 0.0
  %430 = vmatprep.subr.mxu0 0.0
  %431 = vmatpush1.msra.mxu0 0.0
  %432 = vmatprep.subr.mxu0 0.0
  %433 = vmatpush1.msra.mxu0 0.0
  %434 = vmatprep.subr.mxu0 0.0
  %435 = vmatpush1.msra.mxu0 0.0
  %436 = vmatprep.subr.mxu0 0.0
  %437 = vmatpush1.msra.mxu0 0.0
  %438 = vmatprep.subr.mxu0 0.0
  %439 = vmatpush1.msra.mxu0 0.0
  %440 = vmatprep.subr.mxu0 0.0
  %441 = vmatpush1.msra.mxu0 0.0
  %442 = vmatprep.subr.mxu0 0.0
  %443 = vmatpush1.msra.mxu0 0.0
  %444 = vmatprep.subr.mxu0 0.0
  %445 = vmatpush1.msra.mxu0 0.0
  %446 = vmatprep.subr.mxu0 0.0
  %447 = vmatpush1.msra.mxu0 0.0
  %448 = vmatprep.subr.mxu0 0.0
  %449 = vmatpush1.msra.mxu0 0.0
  %450 = vmatprep.subr.mxu0 0.0
  %451 = vmatpush1.msra.mxu0 0.0
  %452 = vmatprep.subr.mxu0 0.0
  %453 = vmatpush1.msra.mxu0 0.0
  %454 = vmatprep.subr.mxu0 0.0
  %455 = vmatpush1.msra.mxu0 0.0
  %456 = vmatprep.subr.mxu0 0.0
  %457 = vmatpush1.msra.mxu0 0.0
  %458 = vmatprep.subr.mxu0 0.0
  %459 = vmatpush1.msra.mxu0 0.0
  %460 = vmatprep.subr.mxu0 0.0
  %461 = vmatpush1.msra.mxu0 0.0
  %462 = vmatprep.subr.mxu0 0.0
  %463 = vmatpush1.msra.mxu0 0.0
  %464 = vmatprep.subr.mxu0 0.0
  %465 = vmatpush1.msra.mxu0 0.0
  %466 = vmatprep.subr.mxu0 0.0
  %467 = vmatpush1.msra.mxu0 0.0
  %468 = vmatprep.subr.mxu0 0.0
  %469 = vmatpush1.msra.mxu0 0.0
  %470 = vmatprep.subr.mxu0 0.0
  %471 = vmatpush1.msra.mxu0 0.0
  %472 = vmatprep.subr.mxu0 0.0
  %473 = vmatpush1.msra.mxu0 0.0
  %474 = vmatprep.subr.mxu0 0.0
  %475 = vmatpush1.msra.mxu0 0.0
  %476 = vmatprep.subr.mxu0 0.0
  %477 = vmatpush1.msra.mxu0 0.0
  %478 = vmatprep.subr.mxu0 0.0
  %479 = vmatpush1.msra.mxu0 0.0
  %480 = vmatprep.mubr.f32.mxu0 0.0
  %481 = vmatmul.mubr.f32.gmra.mrb[0].mxu0 %v414
  %v482 = vpop.f32.mrb[0].mxu0
  %v483 = vadd.f32 0.0, %v482
  %v484 = vpop.f32.mrb[0].mxu0
  %485 = vdwg.mxu0
  %v486 = vadd.f32 %v75, %v483
  %v487 = vsub.f32 0.0, %v486
  %v488 = vmul.f32 %v487, 1.442695
  %v489 = vpow.pop %v488
  %v490 = vadd.f32 %v489, 1.0
  %v491 = vrcp.pop %v490
  %v492 = vmul.f32 1.0, %v491
  %v493 = vtanh.pop %v486
  %v494 = vmul.f32 %v492, %v404
  %496 = vrot.lane.b32.xlu0 %v493, 64
  %v497 = vpop.permute.xlu0 %496
  %v499 = vmul.f32 %v492, %v497
  %501 = vrot.lane.b32.xlu0 %v499, 32
  %v502 = vpop.permute.xlu0 %501
  %v504 = vadd.f32 %v494, %v502
  %v505 = vtanh.pop %v504
  %507 = vrot.lane.b32.xlu0 %v505, 64
  %v508 = vpop.permute.xlu0 %507
  %v510 = vmul.f32 %v492, %v508
  %512 = vrot.lane.b32.xlu0 %v510, 32
  %v513 = vpop.permute.xlu0 %512
  %v514 = vsel %vm112, %v513, 0
  %516 = vmatprep.subr.mxu0 0.0
  %517 = vmatpush1.msra.mxu0 %v24
  %518 = vmatprep.subr.mxu0 0.0
  %519 = vmatpush1.msra.mxu0 %v25
  %520 = vmatprep.subr.mxu0 0.0
  %521 = vmatpush1.msra.mxu0 %v26
  %522 = vmatprep.subr.mxu0 0.0
  %523 = vmatpush1.msra.mxu0 %v27
  %524 = vmatprep.subr.mxu0 0.0
  %525 = vmatpush1.msra.mxu0 0.0
  %526 = vmatprep.subr.mxu0 0.0
  %527 = vmatpush1.msra.mxu0 0.0
  %528 = vmatprep.subr.mxu0 0.0
  %529 = vmatpush1.msra.mxu0 0.0
  %530 = vmatprep.subr.mxu0 0.0
  %531 = vmatpush1.msra.mxu0 0.0
  %532 = vmatprep.subr.mxu0 0.0
  %533 = vmatpush1.msra.mxu0 0.0
  %534 = vmatprep.subr.mxu0 0.0
  %535 = vmatpush1.msra.mxu0 0.0
  %536 = vmatprep.subr.mxu0 0.0
  %537 = vmatpush1.msra.mxu0 0.0
  %538 = vmatprep.subr.mxu0 0.0
  %539 = vmatpush1.msra.mxu0 0.0
  %540 = vmatprep.subr.mxu0 0.0
  %541 = vmatpush1.msra.mxu0 0.0
  %542 = vmatprep.subr.mxu0 0.0
  %543 = vmatpush1.msra.mxu0 0.0
  %544 = vmatprep.subr.mxu0 0.0
  %545 = vmatpush1.msra.mxu0 0.0
  %546 = vmatprep.subr.mxu0 0.0
  %547 = vmatpush1.msra.mxu0 0.0
  %548 = vmatprep.subr.mxu0 0.0
  %549 = vmatpush1.msra.mxu0 0.0
  %550 = vmatprep.subr.mxu0 0.0
  %551 = vmatpush1.msra.mxu0 0.0
  %552 = vmatprep.subr.mxu0 0.0
  %553 = vmatpush1.msra.mxu0 0.0
  %554 = vmatprep.subr.mxu0 0.0
  %555 = vmatpush1.msra.mxu0 0.0
  %556 = vmatprep.subr.mxu0 0.0
  %557 = vmatpush1.msra.mxu0 0.0
  %558 = vmatprep.subr.mxu0 0.0
  %559 = vmatpush1.msra.mxu0 0.0
  %560 = vmatprep.subr.mxu0 0.0
  %561 = vmatpush1.msra.mxu0 0.0
  %562 = vmatprep.subr.mxu0 0.0
  %563 = vmatpush1.msra.mxu0 0.0
  %564 = vmatprep.subr.mxu0 0.0
  %565 = vmatpush1.msra.mxu0 0.0
  %566 = vmatprep.subr.mxu0 0.0
  %567 = vmatpush1.msra.mxu0 0.0
  %568 = vmatprep.subr.mxu0 0.0
  %569 = vmatpush1.msra.mxu0 0.0
  %570 = vmatprep.subr.mxu0 0.0
  %571 = vmatpush1.msra.mxu0 0.0
  %572 = vmatprep.subr.mxu0 0.0
  %573 = vmatpush1.msra.mxu0 0.0
  %574 = vmatprep.subr.mxu0 0.0
  %575 = vmatpush1.msra.mxu0 0.0
  %576 = vmatprep.subr.mxu0 0.0
  %577 = vmatpush1.msra.mxu0 0.0
  %578 = vmatprep.subr.mxu0 0.0
  %579 = vmatpush1.msra.mxu0 0.0
  %580 = vmatprep.mubr.f32.mxu0 0.0
  %581 = vmatmul.mubr.f32.gmra.mrb[0].mxu0 %v514
  %v582 = vpop.f32.mrb[0].mxu0
  %v583 = vadd.f32 0.0, %v582
  %v584 = vpop.f32.mrb[0].mxu0
  %585 = vdwg.mxu0
  %v586 = vadd.f32 %v84, %v583
  %v587 = vsub.f32 0.0, %v586
  %v588 = vmul.f32 %v587, 1.442695
  %v589 = vpow.pop %v588
  %v590 = vadd.f32 %v589, 1.0
  %v591 = vrcp.pop %v590
  %v592 = vmul.f32 1.0, %v591
  %v593 = vtanh.pop %v586
  %v594 = vmul.f32 %v592, %v504
  %596 = vrot.lane.b32.xlu0 %v593, 64
  %v597 = vpop.permute.xlu0 %596
  %v599 = vmul.f32 %v592, %v597
  %601 = vrot.lane.b32.xlu0 %v599, 32
  %v602 = vpop.permute.xlu0 %601
  %v604 = vadd.f32 %v594, %v602
  %v605 = vtanh.pop %v604
  %607 = vrot.lane.b32.xlu0 %v605, 64
  %v608 = vpop.permute.xlu0 %607
  %v610 = vmul.f32 %v592, %v608
  %612 = vrot.lane.b32.xlu0 %v610, 32
  %v613 = vpop.permute.xlu0 %612
  %v614 = vsel %vm112, %v613, 0
  %616 = vmatprep.subr.mxu0 0.0
  %617 = vmatpush1.msra.mxu0 %v24
  %618 = vmatprep.subr.mxu0 0.0
  %619 = vmatpush1.msra.mxu0 %v25
  %620 = vmatprep.subr.mxu0 0.0
  %621 = vmatpush1.msra.mxu0 %v26
  %622 = vmatprep.subr.mxu0 0.0
  %623 = vmatpush1.msra.mxu0 %v27
  %624 = vmatprep.subr.mxu0 0.0
  %625 = vmatpush1.msra.mxu0 0.0
  %626 = vmatprep.subr.mxu0 0.0
  %627 = vmatpush1.msra.mxu0 0.0
  %628 = vmatprep.subr.mxu0 0.0
  %629 = vmatpush1.msra.mxu0 0.0
  %630 = vmatprep.subr.mxu0 0.0
  %631 = vmatpush1.msra.mxu0 0.0
  %632 = vmatprep.subr.mxu0 0.0
  %633 = vmatpush1.msra.mxu0 0.0
  %634 = vmatprep.subr.mxu0 0.0
  %635 = vmatpush1.msra.mxu0 0.0
  %636 = vmatprep.subr.mxu0 0.0
  %637 = vmatpush1.msra.mxu0 0.0
  %638 = vmatprep.subr.mxu0 0.0
  %639 = vmatpush1.msra.mxu0 0.0
  %640 = vmatprep.subr.mxu0 0.0
  %641 = vmatpush1.msra.mxu0 0.0
  %642 = vmatprep.subr.mxu0 0.0
  %643 = vmatpush1.msra.mxu0 0.0
  %644 = vmatprep.subr.mxu0 0.0
  %645 = vmatpush1.msra.mxu0 0.0
  %646 = vmatprep.subr.mxu0 0.0
  %647 = vmatpush1.msra.mxu0 0.0
  %648 = vmatprep.subr.mxu0 0.0
  %649 = vmatpush1.msra.mxu0 0.0
  %650 = vmatprep.subr.mxu0 0.0
  %651 = vmatpush1.msra.mxu0 0.0
  %652 = vmatprep.subr.mxu0 0.0
  %653 = vmatpush1.msra.mxu0 0.0
  %654 = vmatprep.subr.mxu0 0.0
  %655 = vmatpush1.msra.mxu0 0.0
  %656 = vmatprep.subr.mxu0 0.0
  %657 = vmatpush1.msra.mxu0 0.0
  %658 = vmatprep.subr.mxu0 0.0
  %659 = vmatpush1.msra.mxu0 0.0
  %660 = vmatprep.subr.mxu0 0.0
  %661 = vmatpush1.msra.mxu0 0.0
  %662 = vmatprep.subr.mxu0 0.0
  %663 = vmatpush1.msra.mxu0 0.0
  %664 = vmatprep.subr.mxu0 0.0
  %665 = vmatpush1.msra.mxu0 0.0
  %666 = vmatprep.subr.mxu0 0.0
  %667 = vmatpush1.msra.mxu0 0.0
  %668 = vmatprep.subr.mxu0 0.0
  %669 = vmatpush1.msra.mxu0 0.0
  %670 = vmatprep.subr.mxu0 0.0
  %671 = vmatpush1.msra.mxu0 0.0
  %672 = vmatprep.subr.mxu0 0.0
  %673 = vmatpush1.msra.mxu0 0.0
  %674 = vmatprep.subr.mxu0 0.0
  %675 = vmatpush1.msra.mxu0 0.0
  %676 = vmatprep.subr.mxu0 0.0
  %677 = vmatpush1.msra.mxu0 0.0
  %678 = vmatprep.subr.mxu0 0.0
  %679 = vmatpush1.msra.mxu0 0.0
  %680 = vmatprep.mubr.f32.mxu0 0.0
  %681 = vmatmul.mubr.f32.gmra.mrb[0].mxu0 %v614
  %v682 = vpop.f32.mrb[0].mxu0
  %v683 = vadd.f32 0.0, %v682
  %v684 = vpop.f32.mrb[0].mxu0
  %685 = vdwg.mxu0
  %v686 = vadd.f32 %v93, %v683
  %v687 = vsub.f32 0.0, %v686
  %v688 = vmul.f32 %v687, 1.442695
  %v689 = vpow.pop %v688
  %v690 = vadd.f32 %v689, 1.0
  %v691 = vrcp.pop %v690
  %v692 = vmul.f32 1.0, %v691
  %v693 = vtanh.pop %v686
  %v694 = vmul.f32 %v692, %v604
  %696 = vrot.lane.b32.xlu0 %v693, 64
  %v697 = vpop.permute.xlu0 %696
  %v699 = vmul.f32 %v692, %v697
  %701 = vrot.lane.b32.xlu0 %v699, 32
  %v702 = vpop.permute.xlu0 %701
  %v704 = vadd.f32 %v694, %v702
  %v705 = vtanh.pop %v704
  %707 = vrot.lane.b32.xlu0 %v705, 64
  %v708 = vpop.permute.xlu0 %707
  %v710 = vmul.f32 %v692, %v708
  %712 = vrot.lane.b32.xlu0 %v710, 32
  %v713 = vpop.permute.xlu0 %712
  %v714 = vsel %vm112, %v713, 0
  %716 = vmatprep.subr.mxu0 0.0
  %717 = vmatpush1.msra.mxu0 %v24
  %718 = vmatprep.subr.mxu0 0.0
  %719 = vmatpush1.msra.mxu0 %v25
  %720 = vmatprep.subr.mxu0 0.0
  %721 = vmatpush1.msra.mxu0 %v26
  %722 = vmatprep.subr.mxu0 0.0
  %723 = vmatpush1.msra.mxu0 %v27
  %724 = vmatprep.subr.mxu0 0.0
  %725 = vmatpush1.msra.mxu0 0.0
  %726 = vmatprep.subr.mxu0 0.0
  %727 = vmatpush1.msra.mxu0 0.0
  %728 = vmatprep.subr.mxu0 0.0
  %729 = vmatpush1.msra.mxu0 0.0
  %730 = vmatprep.subr.mxu0 0.0
  %731 = vmatpush1.msra.mxu0 0.0
  %732 = vmatprep.subr.mxu0 0.0
  %733 = vmatpush1.msra.mxu0 0.0
  %734 = vmatprep.subr.mxu0 0.0
  %735 = vmatpush1.msra.mxu0 0.0
  %736 = vmatprep.subr.mxu0 0.0
  %737 = vmatpush1.msra.mxu0 0.0
  %738 = vmatprep.subr.mxu0 0.0
  %739 = vmatpush1.msra.mxu0 0.0
  %740 = vmatprep.subr.mxu0 0.0
  %741 = vmatpush1.msra.mxu0 0.0
  %742 = vmatprep.subr.mxu0 0.0
  %743 = vmatpush1.msra.mxu0 0.0
  %744 = vmatprep.subr.mxu0 0.0
  %745 = vmatpush1.msra.mxu0 0.0
  %746 = vmatprep.subr.mxu0 0.0
  %747 = vmatpush1.msra.mxu0 0.0
  %748 = vmatprep.subr.mxu0 0.0
  %749 = vmatpush1.msra.mxu0 0.0
  %750 = vmatprep.subr.mxu0 0.0
  %751 = vmatpush1.msra.mxu0 0.0
  %752 = vmatprep.subr.mxu0 0.0
  %753 = vmatpush1.msra.mxu0 0.0
  %754 = vmatprep.subr.mxu0 0.0
  %755 = vmatpush1.msra.mxu0 0.0
  %756 = vmatprep.subr.mxu0 0.0
  %757 = vmatpush1.msra.mxu0 0.0
  %758 = vmatprep.subr.mxu0 0.0
  %759 = vmatpush1.msra.mxu0 0.0
  %760 = vmatprep.subr.mxu0 0.0
  %761 = vmatpush1.msra.mxu0 0.0
  %762 = vmatprep.subr.mxu0 0.0
  %763 = vmatpush1.msra.mxu0 0.0
  %764 = vmatprep.subr.mxu0 0.0
  %765 = vmatpush1.msra.mxu0 0.0
  %766 = vmatprep.subr.mxu0 0.0
  %767 = vmatpush1.msra.mxu0 0.0
  %768 = vmatprep.subr.mxu0 0.0
  %769 = vmatpush1.msra.mxu0 0.0
  %770 = vmatprep.subr.mxu0 0.0
  %771 = vmatpush1.msra.mxu0 0.0
  %772 = vmatprep.subr.mxu0 0.0
  %773 = vmatpush1.msra.mxu0 0.0
  %774 = vmatprep.subr.mxu0 0.0
  %775 = vmatpush1.msra.mxu0 0.0
  %776 = vmatprep.subr.mxu0 0.0
  %777 = vmatpush1.msra.mxu0 0.0
  %778 = vmatprep.subr.mxu0 0.0
  %779 = vmatpush1.msra.mxu0 0.0
  %780 = vmatprep.mubr.f32.mxu0 0.0
  %781 = vmatmul.mubr.f32.gmra.mrb[0].mxu0 %v714
  %v782 = vpop.f32.mrb[0].mxu0
  %v783 = vadd.f32 0.0, %v782
  %v784 = vpop.f32.mrb[0].mxu0
  %785 = vdwg.mxu0
  %v786 = vadd.f32 %v102, %v783
  %v787 = vsub.f32 0.0, %v786
  %v788 = vmul.f32 %v787, 1.442695
  %v789 = vpow.pop %v788
  %v790 = vadd.f32 %v789, 1.0
  %v791 = vrcp.pop %v790
  %v792 = vmul.f32 1.0, %v791
  %v793 = vtanh.pop %v786
  %v794 = vmul.f32 %v792, %v704
  %796 = vrot.lane.b32.xlu0 %v793, 64
  %v797 = vpop.permute.xlu0 %796
  %v799 = vmul.f32 %v792, %v797
  %801 = vrot.lane.b32.xlu0 %v799, 32
  %v802 = vpop.permute.xlu0 %801
  %v804 = vadd.f32 %v794, %v802
  %v805 = vtanh.pop %v804
  %807 = vrot.lane.b32.xlu0 %v805, 64
  %v808 = vpop.permute.xlu0 %807
  %v810 = vmul.f32 %v792, %v808
  %812 = vrot.lane.b32.xlu0 %v810, 32
  %v813 = vpop.permute.xlu0 %812
  %v814 = vsel %vm112, %v813, 0
  %816 = vmatprep.subr.mxu0 0.0
  %817 = vmatpush1.msra.mxu0 %v24
  %818 = vmatprep.subr.mxu0 0.0
  %819 = vmatpush1.msra.mxu0 %v25
  %820 = vmatprep.subr.mxu0 0.0
  %821 = vmatpush1.msra.mxu0 %v26
  %822 = vmatprep.subr.mxu0 0.0
  %823 = vmatpush1.msra.mxu0 %v27
  %824 = vmatprep.subr.mxu0 0.0
  %825 = vmatpush1.msra.mxu0 0.0
  %826 = vmatprep.subr.mxu0 0.0
  %827 = vmatpush1.msra.mxu0 0.0
  %828 = vmatprep.subr.mxu0 0.0
  %829 = vmatpush1.msra.mxu0 0.0
  %830 = vmatprep.subr.mxu0 0.0
  %831 = vmatpush1.msra.mxu0 0.0
  %832 = vmatprep.subr.mxu0 0.0
  %833 = vmatpush1.msra.mxu0 0.0
  %834 = vmatprep.subr.mxu0 0.0
  %835 = vmatpush1.msra.mxu0 0.0
  %836 = vmatprep.subr.mxu0 0.0
  %837 = vmatpush1.msra.mxu0 0.0
  %838 = vmatprep.subr.mxu0 0.0
  %839 = vmatpush1.msra.mxu0 0.0
  %840 = vmatprep.subr.mxu0 0.0
  %841 = vmatpush1.msra.mxu0 0.0
  %842 = vmatprep.subr.mxu0 0.0
  %843 = vmatpush1.msra.mxu0 0.0
  %844 = vmatprep.subr.mxu0 0.0
  %845 = vmatpush1.msra.mxu0 0.0
  %846 = vmatprep.subr.mxu0 0.0
  %847 = vmatpush1.msra.mxu0 0.0
  %848 = vmatprep.subr.mxu0 0.0
  %849 = vmatpush1.msra.mxu0 0.0
  %850 = vmatprep.subr.mxu0 0.0
  %851 = vmatpush1.msra.mxu0 0.0
  %852 = vmatprep.subr.mxu0 0.0
  %853 = vmatpush1.msra.mxu0 0.0
  %854 = vmatprep.subr.mxu0 0.0
  %855 = vmatpush1.msra.mxu0 0.0
  %856 = vmatprep.subr.mxu0 0.0
  %857 = vmatpush1.msra.mxu0 0.0
  %858 = vmatprep.subr.mxu0 0.0
  %859 = vmatpush1.msra.mxu0 0.0
  %860 = vmatprep.subr.mxu0 0.0
  %861 = vmatpush1.msra.mxu0 0.0
  %862 = vmatprep.subr.mxu0 0.0
  %863 = vmatpush1.msra.mxu0 0.0
  %864 = vmatprep.subr.mxu0 0.0
  %865 = vmatpush1.msra.mxu0 0.0
  %866 = vmatprep.subr.mxu0 0.0
  %867 = vmatpush1.msra.mxu0 0.0
  %868 = vmatprep.subr.mxu0 0.0
  %869 = vmatpush1.msra.mxu0 0.0
  %870 = vmatprep.subr.mxu0 0.0
  %871 = vmatpush1.msra.mxu0 0.0
  %872 = vmatprep.subr.mxu0 0.0
  %873 = vmatpush1.msra.mxu0 0.0
  %874 = vmatprep.subr.mxu0 0.0
  %875 = vmatpush1.msra.mxu0 0.0
  %876 = vmatprep.subr.mxu0 0.0
  %877 = vmatpush1.msra.mxu0 0.0
  %878 = vmatprep.subr.mxu0 0.0
  %879 = vmatpush1.msra.mxu0 0.0
  %880 = vmatprep.mubr.f32.mxu0 0.0
  %881 = vmatmul.mubr.f32.gmra.mrb[0].mxu0 %v814
  %v882 = vpop.f32.mrb[0].mxu0
  %v883 = vadd.f32 0.0, %v882
  %v884 = vpop.f32.mrb[0].mxu0
  %885 = vdwg.mxu0
  %v886 = vadd.f32 %v111, %v883
  %v887 = vsub.f32 0.0, %v886
  %v888 = vmul.f32 %v887, 1.442695
  %v889 = vpow.pop %v888
  %v890 = vadd.f32 %v889, 1.0
  %v891 = vrcp.pop %v890
  %v892 = vmul.f32 1.0, %v891
  %v893 = vtanh.pop %v886
  %v894 = vmul.f32 %v892, %v804
  %896 = vrot.lane.b32.xlu0 %v893, 64
  %v897 = vpop.permute.xlu0 %896
  %v899 = vmul.f32 %v892, %v897
  %901 = vrot.lane.b32.xlu0 %v899, 32
  %v902 = vpop.permute.xlu0 %901
  %v904 = vadd.f32 %v894, %v902
  %v905 = vtanh.pop %v904
  %907 = vrot.lane.b32.xlu0 %v905, 64
  %v908 = vpop.permute.xlu0 %907
  %v910 = vmul.f32 %v892, %v908
  %v911 = vld [vmem:[%s4] sm:$0xff]
  %v912 = vld [vmem:[%s4 + $0x8] sm:$0xff]
  %v913 = vld [vmem:[%s4 + $0x10] sm:$0xff]
  %v914 = vld [vmem:[%s4 + $0x18] sm:$0xff]
  %v915 = vld [vmem:[%s5] sm:$0x1]
  %v917 = vlaneseq
  %v918 = vshrl.u32 %v917, 7
  %v919 = vsub.s32 0, %v918
  %v920 = vrot.slane %v915, %v919
  %923 = vrot.lane.b32.xlu0 %v910, 32
  %v924 = vpop.permute.xlu0 %923
  %v925 = vsel %vm112, %v924, 0
  %927 = vmatprep.subr.mxu0 0.0
  %928 = vmatpush1.msra.mxu0 %v911
  %929 = vmatprep.subr.mxu0 0.0
  %930 = vmatpush1.msra.mxu0 %v912
  %931 = vmatprep.subr.mxu0 0.0
  %932 = vmatpush1.msra.mxu0 %v913
  %933 = vmatprep.subr.mxu0 0.0
  %934 = vmatpush1.msra.mxu0 %v914
  %935 = vmatprep.subr.mxu0 0.0
  %936 = vmatpush1.msra.mxu0 0.0
  %937 = vmatprep.subr.mxu0 0.0
  %938 = vmatpush1.msra.mxu0 0.0
  %939 = vmatprep.subr.mxu0 0.0
  %940 = vmatpush1.msra.mxu0 0.0
  %941 = vmatprep.subr.mxu0 0.0
  %942 = vmatpush1.msra.mxu0 0.0
  %943 = vmatprep.subr.mxu0 0.0
  %944 = vmatpush1.msra.mxu0 0.0
  %945 = vmatprep.subr.mxu0 0.0
  %946 = vmatpush1.msra.mxu0 0.0
  %947 = vmatprep.subr.mxu0 0.0
  %948 = vmatpush1.msra.mxu0 0.0
  %949 = vmatprep.subr.mxu0 0.0
  %950 = vmatpush1.msra.mxu0 0.0
  %951 = vmatprep.subr.mxu0 0.0
  %952 = vmatpush1.msra.mxu0 0.0
  %953 = vmatprep.subr.mxu0 0.0
  %954 = vmatpush1.msra.mxu0 0.0
  %955 = vmatprep.subr.mxu0 0.0
  %956 = vmatpush1.msra.mxu0 0.0
  %957 = vmatprep.subr.mxu0 0.0
  %958 = vmatpush1.msra.mxu0 0.0
  %959 = vmatprep.subr.mxu0 0.0
  %960 = vmatpush1.msra.mxu0 0.0
  %961 = vmatprep.subr.mxu0 0.0
  %962 = vmatpush1.msra.mxu0 0.0
  %963 = vmatprep.subr.mxu0 0.0
  %964 = vmatpush1.msra.mxu0 0.0
  %965 = vmatprep.subr.mxu0 0.0
  %966 = vmatpush1.msra.mxu0 0.0
  %967 = vmatprep.subr.mxu0 0.0
  %968 = vmatpush1.msra.mxu0 0.0
  %969 = vmatprep.subr.mxu0 0.0
  %970 = vmatpush1.msra.mxu0 0.0
  %971 = vmatprep.subr.mxu0 0.0
  %972 = vmatpush1.msra.mxu0 0.0
  %973 = vmatprep.subr.mxu0 0.0
  %974 = vmatpush1.msra.mxu0 0.0
  %975 = vmatprep.subr.mxu0 0.0
  %976 = vmatpush1.msra.mxu0 0.0
  %977 = vmatprep.subr.mxu0 0.0
  %978 = vmatpush1.msra.mxu0 0.0
  %979 = vmatprep.subr.mxu0 0.0
  %980 = vmatpush1.msra.mxu0 0.0
  %981 = vmatprep.subr.mxu0 0.0
  %982 = vmatpush1.msra.mxu0 0.0
  %983 = vmatprep.subr.mxu0 0.0
  %984 = vmatpush1.msra.mxu0 0.0
  %985 = vmatprep.subr.mxu0 0.0
  %986 = vmatpush1.msra.mxu0 0.0
  %987 = vmatprep.subr.mxu0 0.0
  %988 = vmatpush1.msra.mxu0 0.0
  %989 = vmatprep.subr.mxu0 0.0
  %990 = vmatpush1.msra.mxu0 0.0
  %991 = vmatprep.mubr.f32.mxu0 0.0
  %992 = vmatmul.mubr.f32.gmra.mrb[0].mxu0 %v925
  %v993 = vpop.f32.mrb[0].mxu0
  %v994 = vadd.f32 %v920, %v993
  %v995 = vpop.f32.mrb[0].mxu0
  %996 = vdwg.mxu0
  %997 = vst [vmem:[%s6] sm:$0xff] %v994
  // Predicated region
  $region26: #{simple_lstm_forward.1} parent=0 // pred_check
    _
  $region27: #{simple_lstm_forward.1} parent=0 // pred_check_branch
    %999 = sbr.rel (0) target = $region29
  $region28: #{simple_lstm_forward.1} parent=0 // pred_region
    _
  $region29: #{simple_lstm_forward.1} parent=0 // pred_fallthru
    _
  // Predicated region
  $region30: #{simple_lstm_forward.1} parent=0 // pred_check
    _
  $region31: #{simple_lstm_forward.1} parent=0 // pred_check_branch
    %1001 = sbr.rel (0) target = $region33
  $region32: #{simple_lstm_forward.1} parent=0 // pred_region
    _
  $region33: #{simple_lstm_forward.1} parent=0 // pred_fallthru
    _

</llo_original>
